<compile_context>
chip_gen: v7x
topology: tpu7x:2x2x1
jax: 0.10.0
libtpu: 0.0.40
codegen_flags: <defaults>
</compile_context>

<pallas_src>
import jax
import jax.numpy as jnp
from jax.experimental import pallas as pl
from jax.experimental.pallas import tpu as pltpu


def _sigmoid(x):
    # exp goes to the EUP; the divide is negligible at memory-bound.
    return 1.0 / (1.0 + jnp.exp(-x))


def _conf_out_packed_kernel(z_ref, w_ref, b_ref, o_ref):
    # z_ref: (TB, D*P) VMEM  -- P original rows packed per lane-dense row
    # w_ref: (D*P, P)  VMEM  -- block-diagonal replicated weight
    # b_ref: (1, 1)    SMEM
    # o_ref: (TB, P)
    z = z_ref[...].astype(jnp.float32)
    w = w_ref[...].astype(jnp.float32)
    logits = jnp.dot(z, w, preferred_element_type=jnp.float32) + b_ref[0, 0]
    o_ref[...] = _sigmoid(logits).astype(o_ref.dtype)


def _conf_out_rowdot_kernel(z_ref, w_ref, b_ref, o_ref):
    # z_ref: (TB, D) VMEM, w_ref: (1, D) VMEM, b_ref: (1, 1) SMEM, o_ref: (TB, 1)
    z = z_ref[...].astype(jnp.float32)
    w = w_ref[...].astype(jnp.float32)
    # VPU multiply + XLU lane reduce; avoids the N=1 MXU matmul and w.T relayout.
    logits = jnp.sum(z * w, axis=-1, keepdims=True) + b_ref[0, 0]
    o_ref[...] = _sigmoid(logits).astype(o_ref.dtype)


def _pick_tile(rows, row_lane_elems, elem_bytes, budget_bytes=4 * 1024 * 1024):
    """Batch tile: multiple of 8, <= 2048, double-buffered tile well under VMEM."""
    row_bytes = max(row_lane_elems, 128) * elem_bytes  # lanes pad to 128
    tb = budget_bytes // max(row_bytes, 1)
    tb = max(8, min(2048, (tb // 8) * 8))
    return rows if tb >= rows else tb


def conf_out(z, weight, bias):
    """sigmoid(z @ weight.T + bias). z: (B, D), weight: (1, D), bias: (1,) -> (B, 1)."""
    B, D = z.shape
    bias2d = bias.reshape(1, 1).astype(jnp.float32)
    elem_bytes = jnp.dtype(z.dtype).itemsize

    pack = (128 // D) if (D < 128 and 128 % D == 0) else 1

    if pack > 1 and B % pack == 0:
        # Lane-dense packing: P original rows per packed row (free reshape).
        P = pack
        Bp, Dp = B // P, D * P
        zp = z.reshape(Bp, Dp)
        # (Dp, P) block-diagonal weight: column g holds w in rows g*D:(g+1)*D.
        w_block = jnp.kron(jnp.eye(P, dtype=weight.dtype), weight.reshape(D, 1))
        TB = _pick_tile(Bp, Dp, elem_bytes)
        out = pl.pallas_call(
            _conf_out_packed_kernel,
            out_shape=jax.ShapeDtypeStruct((Bp, P), z.dtype),
            grid_spec=pltpu.PrefetchScalarGridSpec(
                num_scalar_prefetch=0,
                grid=(pl.cdiv(Bp, TB),),
                in_specs=[
                    pl.BlockSpec((TB, Dp), lambda i: (i, 0)),
                    pl.BlockSpec((Dp, P), lambda i: (0, 0)),
                    pl.BlockSpec(memory_space=pltpu.SMEM),
                ],
                out_specs=pl.BlockSpec((TB, P), lambda i: (i, 0)),
            ),
            compiler_params=pltpu.CompilerParams(
                dimension_semantics=("parallel",)),
        )(zp, w_block, bias2d)
        # Row-major: out[r, g] is the logit of original row r*P + g.
        return out.reshape(B, 1)

    # General path (D >= 128 or non-divisible): batch-tiled mul + lane reduce.
    TB = _pick_tile(B, D, elem_bytes)
    return pl.pallas_call(
        _conf_out_rowdot_kernel,
        out_shape=jax.ShapeDtypeStruct((B, 1), z.dtype),
        grid_spec=pltpu.PrefetchScalarGridSpec(
            num_scalar_prefetch=0,
            grid=(pl.cdiv(B, TB),),
            in_specs=[
                pl.BlockSpec((TB, D), lambda i: (i, 0)),
                pl.BlockSpec((1, D), lambda i: (0, 0)),
                pl.BlockSpec(memory_space=pltpu.SMEM),
            ],
            out_specs=pl.BlockSpec((TB, 1), lambda i: (i, 0)),
        ),
        compiler_params=pltpu.CompilerParams(
            dimension_semantics=("parallel",)),
    )(z, weight, bias2d)


if __name__ == "__main__":
    # Deterministic parameter init (synthetic, mimics nn.Linear(latent_dim, 1)).
    key = jax.random.PRNGKey(0)
    kz, kw, kb, kz2, kw2, kb2 = jax.random.split(key, 6)

    # --- Case 1: latent_dim < 128 (lane-dense packed path), as in the module. ---
    latent_dim = 32
    batch = 8
    z = jax.random.normal(kz, (batch, latent_dim), dtype=jnp.float32)
    bound = 1.0 / (latent_dim ** 0.5)  # PyTorch default Linear init range
    weight = jax.random.uniform(kw, (1, latent_dim), dtype=jnp.float32,
                                minval=-bound, maxval=bound)
    bias = jax.random.uniform(kb, (1,), dtype=jnp.float32,
                              minval=-bound, maxval=bound)

    conf = jax.block_until_ready(conf_out(z, weight, bias))
    ref = jax.nn.sigmoid(z @ weight.T + bias)
    assert conf.shape == (batch, 1)
    assert jnp.allclose(conf, ref, atol=1e-5, rtol=1e-5)

    # --- Case 2: latent_dim >= 128 (mul + lane-reduce path). ---
    latent_dim2 = 160
    z2 = jax.random.normal(kz2, (batch, latent_dim2), dtype=jnp.float32)
    bound2 = 1.0 / (latent_dim2 ** 0.5)
    weight2 = jax.random.uniform(kw2, (1, latent_dim2), dtype=jnp.float32,
                                 minval=-bound2, maxval=bound2)
    bias2 = jax.random.uniform(kb2, (1,), dtype=jnp.float32,
                               minval=-bound2, maxval=bound2)

    conf2 = jax.block_until_ready(conf_out(z2, weight2, bias2))
    ref2 = jax.nn.sigmoid(z2 @ weight2.T + bias2)
    assert conf2.shape == (batch, 1)
    assert jnp.allclose(conf2, ref2, atol=1e-5, rtol=1e-5)

    print("KERNEL_OK")
</pallas_src>

<mosaic_0001>
module attributes {stable_mosaic.version = 11 : i64} {
  func.func @_conf_out_packed_kernel(%arg0: i32, %arg1: memref<2x128xf32, #tpu.memory_space<vmem>>, %arg2: memref<128x4xf32, #tpu.memory_space<vmem>>, %arg3: memref<1x1xf32, #tpu.memory_space<smem>>, %arg4: memref<2x4xf32, #tpu.memory_space<vmem>>) attributes {dimension_semantics = [#tpu.dimension_semantics<parallel>], iteration_bounds = array<i64: 1>, scalar_prefetch = 0 : i64, scratch_operands = 0 : i64, tpu.core_type = #tpu.core_type<tc>, window_params = [{transform_indices = @transform_0, window_bounds = array<i64: 2, 128>}, {pipeline_mode = #tpu.pipeline_mode<synchronous>, transform_indices = @transform_1, window_bounds = array<i64: 128, 4>}, {transform_indices = @transform_2, window_bounds = array<i64: 1, 1>}, {transform_indices = @transform_3, window_bounds = array<i64: 2, 4>}]} {
    %c0 = arith.constant 0 : index
    %c0_0 = arith.constant 0 : index
    %0 = vector.load %arg1[%c0, %c0_0] : memref<2x128xf32, #tpu.memory_space<vmem>>, vector<2x128xf32>
    %c0_1 = arith.constant 0 : index
    %c0_2 = arith.constant 0 : index
    %1 = vector.load %arg2[%c0_1, %c0_2] : memref<128x4xf32, #tpu.memory_space<vmem>>, vector<128x4xf32>
    %cst = arith.constant dense<0.000000e+00> : vector<2x4xf32>
    %2 = tpu.matmul %0, %1, %cst {dimension_numbers = #tpu.dot_dimension_numbers<[1], [0], [0], [1], [0, 0, 1, 1], [], []>} : vector<2x128xf32>, vector<128x4xf32>, vector<2x4xf32> -> vector<2x4xf32>
    %c0_3 = arith.constant 0 : index
    %c0_4 = arith.constant 0 : index
    %3 = memref.load %arg3[%c0_3, %c0_4] : memref<1x1xf32, #tpu.memory_space<smem>>
    %4 = vector.broadcast %3 : f32 to vector<2x4xf32>
    %5 = arith.addf %2, %4 : vector<2x4xf32>
    %cst_5 = arith.constant 0.000000e+00 : f32
    %6 = vector.broadcast %cst_5 : f32 to vector<2x4xf32>
    %7 = arith.subf %6, %5 : vector<2x4xf32>
    %8 = math.exp %7 : vector<2x4xf32>
    %cst_6 = arith.constant 1.000000e+00 : f32
    %9 = vector.broadcast %cst_6 : f32 to vector<2x4xf32>
    %10 = arith.addf %9, %8 : vector<2x4xf32>
    %cst_7 = arith.constant 1.000000e+00 : f32
    %11 = vector.broadcast %cst_7 : f32 to vector<2x4xf32>
    %12 = arith.divf %11, %10 : vector<2x4xf32>
    %c0_8 = arith.constant 0 : index
    %c0_9 = arith.constant 0 : index
    %13 = vector.load %arg4[%c0_8, %c0_9] : memref<2x4xf32, #tpu.memory_space<vmem>>, vector<2x4xf32>
    tpu.vector_store %arg4[%c0_8, %c0_9], %12 {strides = array<i32>} : memref<2x4xf32, #tpu.memory_space<vmem>>, vector<2x4xf32>,
    return
  }
  func.func @transform_0(%arg0: i32) -> (i32, i32) {
    %c0_i32 = arith.constant 0 : i32
    %c0_i32_0 = arith.constant 0 : i32
    return %arg0, %c0_i32 : i32, i32
  }
  func.func @transform_1(%arg0: i32) -> (i32, i32) {
    %c0_i32 = arith.constant 0 : i32
    %c0_i32_0 = arith.constant 0 : i32
    %c0_i32_1 = arith.constant 0 : i32
    return %c0_i32, %c0_i32_0 : i32, i32
  }
  func.func @transform_2(%arg0: i32) -> (i32, i32) {
    %c0_i32 = arith.constant 0 : i32
    %c0_i32_0 = arith.constant 0 : i32
    %c0_i32_1 = arith.constant 0 : i32
    return %c0_i32, %c0_i32_0 : i32, i32
  }
  func.func @transform_3(%arg0: i32) -> (i32, i32) {
    %c0_i32 = arith.constant 0 : i32
    %c0_i32_0 = arith.constant 0 : i32
    return %arg0, %c0_i32 : i32, i32
  }
}

</mosaic_0001>

<llo_original>
// kernel: tpu_custom_call.1
$region0: #{tpu_custom_call.1}
  #allocation0 [shape = 'u32[]', space=smem, size = 0x4, offset = 0x4, fixed_abs, tag = 'smem constant byte address 0x4 - core index']
  #allocation1 [shape = 'u32[144,128]{1,0:T(1,128)}', space=vmem, size = 0x12000, scoped, tag = 'internal scratch']
  #allocation2 [shape = 'f32[1,1]{1,0:T(1,128)S(6)}', space=smem, size = 0x200, scoped, tag = 'scoped memory for tpu_custom_call.1']
  %s0 = inlined_call_operand.vmem [shape: f32[2,128], index: 0, kind: input, shape index: {}]
  %s1 = inlined_call_operand.vmem [shape: f32[128,4], index: 1, kind: input, shape index: {}]
  %s2 = inlined_call_operand.<no memory space> [shape: f32[1,1], index: 2, kind: input, shape index: {}]
  %s3 = inlined_call_operand.hbm [shape: f32[2,4], index: 3, kind: output, shape index: {}]
  %s4 = sld [smem:[#allocation0]]
  $region22: #{tpu_custom_call.1} parent=0
    _
  %s6 = ssub.s32 1, %s4
  %s7 = scalar_select 0, %s6, %s4
  %8 = sst [smem:[#allocation2]] %s2
  $region1: #{tpu_custom_call.1} parent=0
    #allocation3 [shape = 'u8[1024]{0}', space=vmem, size = 0x400, scoped, tag = 'output window, operand 0, single buffered']
    #allocation4 [shape = 's32[1]{0}', space=sflag, size = 0x4, scoped, tag = 'scoped memory for tpu_custom_call.1']
    %9 = vsyncpa [#allocation4], 0
    // Predicated region
    $region2: #{tpu_custom_call.1} parent=1 // pred_check
      _
    $region3: #{tpu_custom_call.1} parent=1 // pred_check_branch
      %11 = sbr.rel (0) target = $region5
    $region4: #{tpu_custom_call.1} parent=1 // pred_region
      _
    $region5: #{tpu_custom_call.1} parent=1 // pred_fallthru
      _
    // Predicated region
    $region6: #{tpu_custom_call.1} parent=1 // pred_check
      _
    $region7: #{tpu_custom_call.1} parent=1 // pred_check_branch
      %13 = sbr.rel (0) target = $region9
    $region8: #{tpu_custom_call.1} parent=1 // pred_region
      _
    $region9: #{tpu_custom_call.1} parent=1 // pred_fallthru
      _
    // Predicated region
    $region10: #{tpu_custom_call.1} parent=1 // pred_check
      _
    $region11: #{tpu_custom_call.1} parent=1 // pred_check_branch
      %15 = sbr.rel (0) target = $region13
    $region12: #{tpu_custom_call.1} parent=1 // pred_region
      _
    $region13: #{tpu_custom_call.1} parent=1 // pred_fallthru
      _
    %v16 = vld [vmem:[%s0] sm:$0x3]
    %v17 = vld [vmem:[%s1] sm:$0xff]
    %v18 = vld [vmem:[%s1 + $0x8] sm:$0xff]
    %v19 = vld [vmem:[%s1 + $0x10] sm:$0xff]
    %v20 = vld [vmem:[%s1 + $0x18] sm:$0xff]
    %v21 = vld [vmem:[%s1 + $0x20] sm:$0xff]
    %v22 = vld [vmem:[%s1 + $0x28] sm:$0xff]
    %v23 = vld [vmem:[%s1 + $0x30] sm:$0xff]
    %v24 = vld [vmem:[%s1 + $0x38] sm:$0xff]
    %v25 = vld [vmem:[%s1 + $0x40] sm:$0xff]
    %v26 = vld [vmem:[%s1 + $0x48] sm:$0xff]
    %v27 = vld [vmem:[%s1 + $0x50] sm:$0xff]
    %v28 = vld [vmem:[%s1 + $0x58] sm:$0xff]
    %v29 = vld [vmem:[%s1 + $0x60] sm:$0xff]
    %v30 = vld [vmem:[%s1 + $0x68] sm:$0xff]
    %v31 = vld [vmem:[%s1 + $0x70] sm:$0xff]
    %v32 = vld [vmem:[%s1 + $0x78] sm:$0xff]
    %s33 = sld [smem:[#allocation2]]
    %v34 = vstv %s33
    %35 = vmatprep.subr.mxu0 0.0
    %36 = vmatpush1.msra.mxu0 %v17
    %37 = vmatprep.subr.mxu0 0.0
    %38 = vmatpush1.msra.mxu0 %v18
    %39 = vmatprep.subr.mxu0 0.0
    %40 = vmatpush1.msra.mxu0 %v19
    %41 = vmatprep.subr.mxu0 0.0
    %42 = vmatpush1.msra.mxu0 %v20
    %43 = vmatprep.subr.mxu0 0.0
    %44 = vmatpush1.msra.mxu0 %v21
    %45 = vmatprep.subr.mxu0 0.0
    %46 = vmatpush1.msra.mxu0 %v22
    %47 = vmatprep.subr.mxu0 0.0
    %48 = vmatpush1.msra.mxu0 %v23
    %49 = vmatprep.subr.mxu0 0.0
    %50 = vmatpush1.msra.mxu0 %v24
    %51 = vmatprep.subr.mxu0 0.0
    %52 = vmatpush1.msra.mxu0 %v25
    %53 = vmatprep.subr.mxu0 0.0
    %54 = vmatpush1.msra.mxu0 %v26
    %55 = vmatprep.subr.mxu0 0.0
    %56 = vmatpush1.msra.mxu0 %v27
    %57 = vmatprep.subr.mxu0 0.0
    %58 = vmatpush1.msra.mxu0 %v28
    %59 = vmatprep.subr.mxu0 0.0
    %60 = vmatpush1.msra.mxu0 %v29
    %61 = vmatprep.subr.mxu0 0.0
    %62 = vmatpush1.msra.mxu0 %v30
    %63 = vmatprep.subr.mxu0 0.0
    %64 = vmatpush1.msra.mxu0 %v31
    %65 = vmatprep.subr.mxu0 0.0
    %66 = vmatpush1.msra.mxu0 %v32
    %67 = vmatprep.subr.mxu0 0.0
    %68 = vmatpush1.msra.mxu0 0.0
    %69 = vmatprep.subr.mxu0 0.0
    %70 = vmatpush1.msra.mxu0 0.0
    %71 = vmatprep.subr.mxu0 0.0
    %72 = vmatpush1.msra.mxu0 0.0
    %73 = vmatprep.subr.mxu0 0.0
    %74 = vmatpush1.msra.mxu0 0.0
    %75 = vmatprep.subr.mxu0 0.0
    %76 = vmatpush1.msra.mxu0 0.0
    %77 = vmatprep.subr.mxu0 0.0
    %78 = vmatpush1.msra.mxu0 0.0
    %79 = vmatprep.subr.mxu0 0.0
    %80 = vmatpush1.msra.mxu0 0.0
    %81 = vmatprep.subr.mxu0 0.0
    %82 = vmatpush1.msra.mxu0 0.0
    %83 = vmatprep.subr.mxu0 0.0
    %84 = vmatpush1.msra.mxu0 0.0
    %85 = vmatprep.subr.mxu0 0.0
    %86 = vmatpush1.msra.mxu0 0.0
    %87 = vmatprep.subr.mxu0 0.0
    %88 = vmatpush1.msra.mxu0 0.0
    %89 = vmatprep.subr.mxu0 0.0
    %90 = vmatpush1.msra.mxu0 0.0
    %91 = vmatprep.subr.mxu0 0.0
    %92 = vmatpush1.msra.mxu0 0.0
    %93 = vmatprep.subr.mxu0 0.0
    %94 = vmatpush1.msra.mxu0 0.0
    %95 = vmatprep.subr.mxu0 0.0
    %96 = vmatpush1.msra.mxu0 0.0
    %97 = vmatprep.subr.mxu0 0.0
    %98 = vmatpush1.msra.mxu0 0.0
    %99 = vmatprep.mubr.f32.mxu0 0.0
    %100 = vmatmul.mubr.f32.gmra.mrb[0].mxu0 %v16
    %v101 = vpop.f32.mrb[0].mxu0
    %v102 = vadd.f32 %v34, %v101
    %v103 = vpop.f32.mrb[0].mxu0
    %104 = vdwg.mxu0
    %v105 = vsub.f32 0.0, %v102
    %v106 = vmul.f32 %v105, 1.442695
    %v107 = vpow.pop %v106
    %v108 = vadd.f32 %v107, 1.0
    %v109 = vrcp.pop %v108
    %v110 = vmul.f32 1.0, %v109
    %vm111 = vcmask 25600
    %112 = vst.msk [vmem:[#allocation3] sm:$0x3] %vm111, %v110
    // Predicated region
    $region14: #{tpu_custom_call.1} parent=1 // pred_check
      _
    $region15: #{tpu_custom_call.1} parent=1 // pred_check_branch
      %114 = sbr.rel (0) target = $region17
    $region16: #{tpu_custom_call.1} parent=1 // pred_region
      %s116 = ssub.s32 32, 32
      %117 = vsyncadd [#allocation4], %s116
      %s119 = sshll.u32 [#allocation3], 4
      %s120 = int_to_ptr.vmem [resolvable:$true] %s119
      %122 = dma.vmem_to_hbm [thread:$0]  %s120, 32, %s3, [#allocation4]
    $region17: #{tpu_custom_call.1} parent=1 // pred_fallthru
      _
    // Predicated region
    $region18: #{tpu_custom_call.1} parent=1 // pred_check
      _
    $region19: #{tpu_custom_call.1} parent=1 // pred_check_branch
      %124 = sbr.rel (0) target = $region21
    $region20: #{tpu_custom_call.1} parent=1 // pred_region
      %125 = dma.done [#allocation4], 32
    $region21: #{tpu_custom_call.1} parent=1 // pred_fallthru
      _
    %126 = vsyncpa [#allocation4], 1

</llo_original>
